<compile_context>
chip_gen: v5e
topology: v5e:2x2
jax: 0.10.0
libtpu: 0.0.40
codegen_flags: <defaults>
</compile_context>

<pallas_src>
import jax
import jax.numpy as jnp
from jax.experimental import pallas as pl
from jax.experimental.pallas import tpu as pltpu

# ---- small, TPU-friendly shapes consistent with the module's forward ----
BATCH = 2
SEQ = 8            # "position" / context_window_width
D_MODEL = 128      # lane-aligned (real cfg uses 768, also a multiple of 128)
N_CTX = 32         # positional table rows (>= SEQ)
INIT_RANGE = 0.02

_SUBLANE_F32 = 8          # second-minor block dim granularity for f32
_MAX_SEQ_TILE = 512       # keeps 2x out-block + W_pos tile small even at D=4096


def _round_up(x, m):
    return ((x + m - 1) // m) * m


def pos_embed_kernel(wpos_ref, out_ref):
    """wpos_ref: (TS, D) tile of W_pos.   out_ref: (1, TS, D) one batch's tile."""
    out_ref[...] = wpos_ref[...][None, :, :]


def pos_embed(tokens, W_pos):
    """tokens: (B, S) int32 (only its shape is used, exactly like the module);
    W_pos: (n_ctx, d_model) float32.  Returns (B, S, d_model)."""
    B, S = tokens.shape
    n_ctx, D = W_pos.shape
    assert S <= n_ctx

    # Seq tile: multiple of the f32 sublane count, capped for VMEM headroom
    # (v7x has only 64 MiB physical / 32 MiB scoped-default VMEM).
    TS = min(_round_up(S, _SUBLANE_F32), _MAX_SEQ_TILE)
    n_seq_tiles = pl.cdiv(S, TS)

    return pl.pallas_call(
        pos_embed_kernel,
        out_shape=jax.ShapeDtypeStruct((B, S, D), W_pos.dtype),
        # Grid = (seq_tiles, batch); batch is the fastest-varying axis, and the
        # W_pos index_map ignores it, so the (TS, D) W_pos tile stays resident
        # across all B writes of that tile (no redundant input DMA).
        grid=(n_seq_tiles, B),
        in_specs=[
            # (TS, D): TS % 8 == 0 and D is a multiple of 128 (or the full
            # dim), satisfying the (8, 128) BlockSpec constraint for any S.
            pl.BlockSpec((TS, D), lambda s, b: (s, 0)),
        ],
        # Lane-dense output blocks (full D) -> unmasked vector stores; partial
        # last seq tile (when S % TS != 0) is clipped by the writeback DMA.
        out_specs=pl.BlockSpec((1, TS, D), lambda s, b: (b, s, 0)),
        compiler_params=pltpu.CompilerParams(
            # Both axes are independent writes -> shard across the 2 TCs on
            # v7x; costs nothing on single-TC v5e/v6e.
            dimension_semantics=("parallel", "parallel"),
        ),
    )(W_pos)


# ------------- pure-JAX reference (matches the PyTorch forward exactly) -------------
def reference_pos_embed(tokens, W_pos):
    B, S = tokens.shape
    return jnp.broadcast_to(W_pos[:S, :][None, :, :], (B, S, W_pos.shape[1]))


if __name__ == "__main__":
    key = jax.random.PRNGKey(0)
    k_w, k_t = jax.random.split(key)

    # W_pos ~ N(0, init_range) as in nn.init.normal_(std=init_range)
    W_pos = (INIT_RANGE * jax.random.normal(k_w, (N_CTX, D_MODEL))).astype(jnp.float32)
    # token ids are irrelevant to the output values (only their shape matters)
    tokens = jax.random.randint(k_t, (BATCH, SEQ), 0, 1000, dtype=jnp.int32)

    out = pos_embed(tokens, W_pos)
    out = jax.block_until_ready(out)

    ref = reference_pos_embed(tokens, W_pos)
    assert out.shape == (BATCH, SEQ, D_MODEL)
    assert jnp.array_equal(out, ref), float(jnp.max(jnp.abs(out - ref)))

    # Robustness check from the review: a sequence length that is NOT a
    # multiple of 8 (partial last seq tile, OOB writes dropped).
    tokens_odd = tokens[:, :5]
    out_odd = jax.block_until_ready(pos_embed(tokens_odd, W_pos))
    assert jnp.array_equal(out_odd, reference_pos_embed(tokens_odd, W_pos))

    print("KERNEL_OK")
</pallas_src>

<mosaic_0001>
module attributes {stable_mosaic.version = 11 : i64} {
  func.func @pos_embed_kernel(%arg0: i32, %arg1: i32, %arg2: memref<8x128xf32, #tpu.memory_space<vmem>>, %arg3: memref<1x8x128xf32, #tpu.memory_space<vmem>>) attributes {dimension_semantics = [#tpu.dimension_semantics<parallel>, #tpu.dimension_semantics<parallel>], iteration_bounds = array<i64: 1, 2>, scalar_prefetch = 0 : i64, scratch_operands = 0 : i64, tpu.core_type = #tpu.core_type<tc>, window_params = [{transform_indices = @transform_0, window_bounds = array<i64: 8, 128>}, {transform_indices = @transform_1, window_bounds = array<i64: 1, 8, 128>}]} {
    %c0 = arith.constant 0 : index
    %c0_0 = arith.constant 0 : index
    %0 = vector.load %arg2[%c0, %c0_0] : memref<8x128xf32, #tpu.memory_space<vmem>>, vector<8x128xf32>
    %1 = vector.shape_cast %0 : vector<8x128xf32> to vector<1x8x128xf32>
    %c0_1 = arith.constant 0 : index
    %c0_2 = arith.constant 0 : index
    %c0_3 = arith.constant 0 : index
    %2 = vector.load %arg3[%c0_1, %c0_2, %c0_3] : memref<1x8x128xf32, #tpu.memory_space<vmem>>, vector<1x8x128xf32>
    tpu.vector_store %arg3[%c0_1, %c0_2, %c0_3], %1 {strides = array<i32>} : memref<1x8x128xf32, #tpu.memory_space<vmem>>, vector<1x8x128xf32>,
    return
  }
  func.func @transform_0(%arg0: i32, %arg1: i32) -> (i32, i32) {
    %c0_i32 = arith.constant 0 : i32
    %c0_i32_0 = arith.constant 0 : i32
    return %arg0, %c0_i32 : i32, i32
  }
  func.func @transform_1(%arg0: i32, %arg1: i32) -> (i32, i32, i32) {
    %c0_i32 = arith.constant 0 : i32
    %c0_i32_0 = arith.constant 0 : i32
    return %arg1, %arg0, %c0_i32 : i32, i32, i32
  }
}

</mosaic_0001>

<llo_original>
// kernel: tpu_custom_call.1
$region0: #{tpu_custom_call.1}
  #allocation0 [shape = 'u32[]', space=smem, size = 0x4, offset = 0x4, fixed_abs, tag = 'smem constant byte address 0x4 - core index']
  #allocation1 [shape = 'u32[72,128]{1,0:T(1,128)}', space=vmem, size = 0x9000, scoped, tag = 'internal scratch']
  %s0 = inlined_call_operand.hbm [shape: f32[32,128], index: 0, kind: input, shape index: {}]
  %s1 = inlined_call_operand.hbm [shape: f32[2,8,128], index: 1, kind: output, shape index: {}]
  %s2 = sld [smem:[#allocation0]]
  $region41: #{tpu_custom_call.1} parent=0
    _
  %s4 = ssub.s32 1, %s2
  %s5 = scalar_select 0, %s4, %s2
  $region1: #{tpu_custom_call.1} parent=0
    #allocation2 [shape = 'u8[4096]{0}', space=vmem, size = 0x1000, scoped, tag = 'input window, operand 0, single buffered']
    #allocation3 [shape = 's32[2]{0}', space=sflag, size = 0x8, scoped, tag = 'scoped memory for tpu_custom_call.1']
    #allocation4 [shape = 's32[2]{0}', space=sflag, size = 0x8, scoped, tag = 'scoped memory for tpu_custom_call.1']
    #allocation5 [shape = 'u8[8192]{0}', space=vmem, size = 0x2000, scoped, tag = 'output window, operand 0']
    %6 = vsyncpa [#allocation3], 0
    %7 = vsyncpa [#allocation4], 0
    %s8 = scalar_lea.sflag [#allocation4], 1
    %9 = vsyncpa %s8, 0
    loop: start=0, step=1, limit=4
    $region2: #{tpu_custom_call.1} parent=1 // loop_pre_header
      _
    $region3: #{tpu_custom_call.1} parent=1 // loop_header
      %s11 = sphi 0, %s15
      %p12 = scmp.ge.s32.totalorder %s11, 4
      %s18 = sphi 0, %s30
      %s19 = sphi 0, %s26
      %s20 = sphi 0, %s18
      %s21 = sphi 0, %s19
      %s22 = sphi 0, %s20
      %s23 = sphi 0, %s21
      %s33 = sphi 0, %s35
      %s36 = sphi 0, %s33
      %s37 = sphi 0, %s36
      %s53 = sphi 0, %s37
      %s61 = sphi 0, %s63
      %s64 = sphi 0, %s61
      %s65 = sphi 0, %s64
      %s81 = sphi 0, %s65
    $region4: #{tpu_custom_call.1} parent=1 // loop_header_branch
      %14 = sbr.rel (%p12) target = $region8
    $region5: #{tpu_custom_call.1} parent=1 // loop_body
      %s16 = ssub.s32 %s11, 1
      %s17 = ssub.s32 %s11, 2
      %s24 = sadd.s32 1, %s19
      %p25 = scmp.ge.s32.totalorder %s24, 2
      %s26 = scalar_select %p25, 0, %s24
      %s27 = sadd.s32 1, %s18
      %s28 = scalar_select %p25, %s27, %s18
      %p29 = scmp.ge.s32.totalorder %s28, 1
      %s30 = scalar_select %p29, 0, %s28
      %s31 = ssub.s32 %s18, %s30
      %p32 = scmp.eq.s32.totalorder %s31, 0
      %s34 = sadd.s32 %s33, 1
      %s35 = scalar_select %p32, %s33, %s34
      %p38 = pneg %p32
      %p39 = scmp.eq.s32.totalorder %s11, 1
      %p40 = por %p38, %p39
      %p41 = scmp.ne.s32.totalorder %s33, %s36
      %p42 = scmp.eq.s32.totalorder %s11, 0
      %p43 = por %p41, %p42
      %p44 = scmp.ne.s32.totalorder %s33, %s36
      %p45 = scmp.eq.s32.totalorder %s16, 1
      %p46 = por %p44, %p45
      %p47 = scmp.ne.s32.totalorder %s36, %s37
      %p48 = scmp.eq.s32.totalorder %s16, 0
      %p49 = por %p47, %p48
      %p50 = scmp.ne.s32.totalorder %s36, %s37
      %p51 = scmp.eq.s32.totalorder %s17, 1
      %p52 = por %p50, %p51
      %p54 = scmp.ne.s32.totalorder %s37, %s53
      %p55 = scmp.eq.s32.totalorder %s17, 0
      %p56 = por %p54, %p55
      %s57 = ssub.s32 %s19, %s26
      %s58 = ssub.s32 %s18, %s30
      %s59 = sor.u32 %s57, %s58
      %p60 = scmp.eq.s32.totalorder %s59, 0
      %s62 = sadd.s32 %s61, 1
      %s63 = scalar_select %p60, %s61, %s62
      %p66 = pneg %p60
      %p67 = scmp.eq.s32.totalorder %s11, 1
      %p68 = por %p66, %p67
      %p69 = scmp.ne.s32.totalorder %s61, %s64
      %p70 = scmp.eq.s32.totalorder %s11, 0
      %p71 = por %p69, %p70
      %p72 = scmp.ne.s32.totalorder %s61, %s64
      %p73 = scmp.eq.s32.totalorder %s16, 1
      %p74 = por %p72, %p73
      %p75 = scmp.ne.s32.totalorder %s64, %s65
      %p76 = scmp.eq.s32.totalorder %s16, 0
      %p77 = por %p75, %p76
      %p78 = scmp.ne.s32.totalorder %s64, %s65
      %p79 = scmp.eq.s32.totalorder %s17, 1
      %p80 = por %p78, %p79
      %p82 = scmp.ne.s32.totalorder %s65, %s81
      %p83 = scmp.eq.s32.totalorder %s17, 0
      %p84 = por %p82, %p83
      %p85 = scmp.le.s32.totalorder 1, %s11
      %p86 = scmp.lt.s32.totalorder %s11, 3
      %p87 = pnand %p85, %p86
      %p88 = pneg %p87
      // Predicated region
      $region9: #{tpu_custom_call.1} parent=5 // pred_check
        _
      $region10: #{tpu_custom_call.1} parent=5 // pred_check_branch
        %90 = sbr.rel (%p87) target = $region12
      $region11: #{tpu_custom_call.1} parent=5 // pred_region
        %s91 = ssub.s32 %s11, 1
        // Predicated region
        $region13: #{tpu_custom_call.1} parent=11 // pred_check
          %p92 = pneg %p49
        $region14: #{tpu_custom_call.1} parent=11 // pred_check_branch
          %94 = sbr.rel (%p92) target = $region16
        $region15: #{tpu_custom_call.1} parent=11 // pred_region
          %96 = vsyncadd [#allocation3], 0
          %s97 = smul.addr %s20, 8
          %s98 = scalar_lea.hbm %s0, %s97
          %s100 = sshll.u32 %s98, 4
          %s101 = int_to_ptr.hbm [resolvable:$true] %s100
          %s102 = sshll.u32 [#allocation2], 4
          %s103 = int_to_ptr.vmem [resolvable:$true] %s102
          %105 = dma.hbm_to_vmem [thread:$0]  %s101, 128, %s103, [#allocation3]
        $region16: #{tpu_custom_call.1} parent=11 // pred_fallthru
          _
      $region12: #{tpu_custom_call.1} parent=5 // pred_fallthru
        _
      %p106 = scmp.lt.s32.totalorder %s11, 2
      // Predicated region
      $region17: #{tpu_custom_call.1} parent=5 // pred_check
        %p107 = pneg %p106
      $region18: #{tpu_custom_call.1} parent=5 // pred_check_branch
        %109 = sbr.rel (%p107) target = $region20
      $region19: #{tpu_custom_call.1} parent=5 // pred_region
        _
      $region20: #{tpu_custom_call.1} parent=5 // pred_fallthru
        _
      %p110 = scmp.le.s32.totalorder 1, %s11
      %p111 = scmp.lt.s32.totalorder %s11, 3
      %p112 = pnand %p110, %p111
      %p113 = pneg %p112
      // Predicated region
      $region21: #{tpu_custom_call.1} parent=5 // pred_check
        _
      $region22: #{tpu_custom_call.1} parent=5 // pred_check_branch
        %115 = sbr.rel (%p112) target = $region24
      $region23: #{tpu_custom_call.1} parent=5 // pred_region
        %s116 = ssub.s32 %s11, 1
        // Predicated region
        $region25: #{tpu_custom_call.1} parent=23 // pred_check
          %p117 = pneg %p49
        $region26: #{tpu_custom_call.1} parent=23 // pred_check_branch
          %119 = sbr.rel (%p117) target = $region28
        $region27: #{tpu_custom_call.1} parent=23 // pred_region
          %121 = dma.done [#allocation3], 128
        $region28: #{tpu_custom_call.1} parent=23 // pred_fallthru
          _
        %p122 = pneg %p49
        %p123 = pneg %p46
        %p124 = pneg %p77
        %p125 = pneg %p74
        %s126 = sand.u32 %s64, 1
        %s127 = scalar_lea.sflag [#allocation4], %s126
        %s128 = sand.u32 %s64, 1
        %s129 = smul.addr %s128, 8
        %s130 = scalar_lea.vmem [#allocation5], %s129
        %v131 = vld [vmem:[#allocation2] sm:$0xff]
        %132 = vst [vmem:[%s130] sm:$0xff] %v131
        %s133 = sand.u32 %s64, 1
        %s134 = scalar_lea.sflag [#allocation4], %s133
        %s135 = sand.u32 %s64, 1
        %s136 = smul.addr %s135, 8
        %s137 = scalar_lea.vmem [#allocation5], %s136
        // Predicated region
        $region29: #{tpu_custom_call.1} parent=23 // pred_check
          %p138 = pneg %p74
        $region30: #{tpu_custom_call.1} parent=23 // pred_check_branch
          %140 = sbr.rel (%p138) target = $region32
        $region31: #{tpu_custom_call.1} parent=23 // pred_region
          %142 = vsyncadd %s134, 0
          %s143 = sadd.s32 %s20, %s21
          %s144 = smul.addr %s143, 8
          %s145 = scalar_lea.hbm %s1, %s144
          %s147 = sshll.u32 %s137, 4
          %s148 = int_to_ptr.vmem [resolvable:$true] %s147
          %s149 = sshll.u32 %s145, 4
          %s150 = int_to_ptr.hbm [resolvable:$true] %s149
          %152 = dma.vmem_to_hbm [thread:$0]  %s148, 128, %s150, %s134
        $region32: #{tpu_custom_call.1} parent=23 // pred_fallthru
          _
      $region24: #{tpu_custom_call.1} parent=5 // pred_fallthru
        _
      %p153 = scmp.le.s32.totalorder 2, %s11
      // Predicated region
      $region33: #{tpu_custom_call.1} parent=5 // pred_check
        %p154 = pneg %p153
      $region34: #{tpu_custom_call.1} parent=5 // pred_check_branch
        %156 = sbr.rel (%p154) target = $region36
      $region35: #{tpu_custom_call.1} parent=5 // pred_region
        %s157 = ssub.s32 %s11, 2
        // Predicated region
        $region37: #{tpu_custom_call.1} parent=35 // pred_check
          %p158 = pneg %p80
        $region38: #{tpu_custom_call.1} parent=35 // pred_check_branch
          %160 = sbr.rel (%p158) target = $region40
        $region39: #{tpu_custom_call.1} parent=35 // pred_region
          %s161 = sand.u32 %s65, 1
          %s162 = scalar_lea.sflag [#allocation4], %s161
          %s163 = sand.u32 %s65, 1
          %s164 = smul.addr %s163, 8
          %s165 = scalar_lea.vmem [#allocation5], %s164
          %167 = dma.done %s162, 128
        $region40: #{tpu_custom_call.1} parent=35 // pred_fallthru
          _
      $region36: #{tpu_custom_call.1} parent=5 // pred_fallthru
        _
    $region6: #{tpu_custom_call.1} parent=1 // loop_footer
      %s15 = sadd.s32 1, %s11
    $region7: #{tpu_custom_call.1} parent=1 // loop_footer_branch
      %10 = sbr.rel target = $region3
    $region8: #{tpu_custom_call.1} parent=1 // loop_exit
      _
    %168 = vsyncpa [#allocation3], 1
    %s169 = scalar_lea.sflag [#allocation3], 1
    %170 = vsyncpa %s169, 1
    %171 = vsyncpa [#allocation4], 1
    %s172 = scalar_lea.sflag [#allocation4], 1
    %173 = vsyncpa %s172, 1

</llo_original>
